<compile_context>
chip_gen: v7x
topology: tpu7x:2x2x1
jax: 0.10.0
libtpu: 0.0.40
codegen_flags: <defaults>
</compile_context>

<pallas_src>
import functools
from typing import NamedTuple, Optional

import jax
import jax.numpy as jnp
from jax.experimental import pallas as pl
from jax.experimental.pallas import tpu as pltpu

_LANE = 128
_H1, _H2 = 256, 128  # fc1 / fc2 output widths (lane-aligned)


def _round_up(x, m):
    return (x + m - 1) // m * m


# ----------------------------------------------------------------------------
# Kernels
# ----------------------------------------------------------------------------
def _actor_kernel(x_ref, w1_ref, b1_ref, w2_ref, b2_ref, w3_ref, b3_ref,
                  o_ref, *, action_bound):
    """Fused 3-layer MLP, one batch tile per grid step.  All intermediates
    stay in VMEM; matmuls are bf16 MXU with f32 accumulation; bias/relu/tanh
    ride the VPU/EUP slots."""
    x = x_ref[...].astype(jnp.bfloat16)                                 # cast in-kernel
    h1 = jnp.dot(x, w1_ref[...], preferred_element_type=jnp.float32)    # (TB, 256)
    h1 = jnp.maximum(h1 + b1_ref[...], 0.0)
    h2 = jnp.dot(h1.astype(jnp.bfloat16), w2_ref[...],
                 preferred_element_type=jnp.float32)                    # (TB, 128)
    h2 = jnp.maximum(h2 + b2_ref[...], 0.0)
    h3 = jnp.dot(h2.astype(jnp.bfloat16), w3_ref[...],
                 preferred_element_type=jnp.float32)                    # (TB, Ap)
    o_ref[...] = jnp.tanh(h3 + b3_ref[...]) * action_bound              # lane-dense store


def _actor_kernel_ktiled(x_ref, w1_ref, b1_ref, w2_ref, b2_ref, w3_ref, b3_ref,
                         o_ref, acc_ref, *, action_bound):
    """fc1 contraction tiled over a second ("arbitrary") grid axis with an f32
    VMEM accumulator; fc2/fc3/tanh run once on the last K step."""
    k = pl.program_id(1)

    @pl.when(k == 0)
    def _():
        acc_ref[...] = jnp.zeros_like(acc_ref)

    acc_ref[...] += jnp.dot(x_ref[...].astype(jnp.bfloat16), w1_ref[...],
                            preferred_element_type=jnp.float32)

    @pl.when(k == pl.num_programs(1) - 1)
    def _():
        h1 = jnp.maximum(acc_ref[...] + b1_ref[...], 0.0)
        h2 = jnp.dot(h1.astype(jnp.bfloat16), w2_ref[...],
                     preferred_element_type=jnp.float32)
        h2 = jnp.maximum(h2 + b2_ref[...], 0.0)
        h3 = jnp.dot(h2.astype(jnp.bfloat16), w3_ref[...],
                     preferred_element_type=jnp.float32)
        o_ref[...] = jnp.tanh(h3 + b3_ref[...]) * action_bound


# ----------------------------------------------------------------------------
# One-time parameter preparation (hoisted out of the per-call path)
# ----------------------------------------------------------------------------
class PreparedActorParams(NamedTuple):
    w1: jax.Array            # (state_dim or s_pad, 256) bf16
    b1: jax.Array            # (1, 256) f32
    w2: jax.Array            # (256, 128) bf16
    b2: jax.Array            # (1, 128) f32
    w3: jax.Array            # (128, a_pad) bf16
    b3: jax.Array            # (1, a_pad) f32
    state_dim: int
    action_dim: int
    block_k: Optional[int]   # None -> fc1 not K-tiled


def prepare_actor_params(params, *, block_k=None, k_tile_threshold=2048):
    """Pad/cast weights once; reuse the result across forward calls."""
    w1, b1, w2, b2, w3, b3 = params
    w1 = jnp.asarray(w1, jnp.float32)
    state_dim = int(w1.shape[0])
    action_dim = int(jnp.asarray(w3).shape[1])
    a_pad = _round_up(max(action_dim, _LANE), _LANE)

    if block_k is None and state_dim >= k_tile_threshold:
        block_k = 512                        # image-sized states: K-tile fc1
    if block_k is not None:
        block_k = _round_up(max(int(block_k), _LANE), _LANE)
        s_pad = _round_up(state_dim, block_k)
        w1p = (jnp.zeros((s_pad, _H1), jnp.float32)
               .at[:state_dim, :].set(w1).astype(jnp.bfloat16))
    else:
        w1p = w1.astype(jnp.bfloat16)        # unpadded K; MXU handles K < 128

    w2p = jnp.asarray(w2, jnp.float32).astype(jnp.bfloat16)
    w3p = (jnp.zeros((_H2, a_pad), jnp.float32)
           .at[:, :action_dim].set(jnp.asarray(w3, jnp.float32))
           .astype(jnp.bfloat16))
    b1p = jnp.asarray(b1, jnp.float32).reshape(1, _H1)
    b2p = jnp.asarray(b2, jnp.float32).reshape(1, _H2)
    b3p = (jnp.zeros((1, a_pad), jnp.float32)
           .at[:, :action_dim].set(jnp.asarray(b3, jnp.float32).reshape(1, -1)))
    return PreparedActorParams(w1p, b1p, w2p, b2p, w3p, b3p,
                               state_dim, action_dim,
                               None if block_k is None else int(block_k))


# ----------------------------------------------------------------------------
# Forward
# ----------------------------------------------------------------------------
def _choose_block_b(b, k_tiled):
    if b < 256:
        return b                              # one fat step; no row padding
    cap = 256 if k_tiled else 1024            # cap K-tiled tiles (wide x + acc)
    return min(cap, _round_up(-(-b // 2), _LANE))   # >= 2 steps (v7x dual-TC)


def _vmem_capacity_bytes():
    try:
        cap = getattr(pltpu.get_tpu_info(), "vmem_capacity_bytes", None)
        if cap:
            return int(cap)
    except Exception:
        pass
    return 64 << 20                            # conservative: v7x per-TC VMEM


def actor_forward(x, params, action_bound, *, block_b=None):
    """x: any shape (B, ...), flattened to (B, state_dim) like x.view(B, -1).
    `params` is a raw (w1,b1,w2,b2,w3,b3) tuple or (preferred, reusable) a
    PreparedActorParams from prepare_actor_params."""
    if not isinstance(params, PreparedActorParams):
        params = prepare_actor_params(params)
    p = params

    b = x.shape[0]
    x2d = x.reshape(b, -1).astype(jnp.float32)          # x.view(B, -1)
    if x2d.shape[1] != p.state_dim:
        raise ValueError(
            f"flattened state dim {x2d.shape[1]} != expected {p.state_dim}")

    a_pad = p.w3.shape[1]
    k_tiled = p.block_k is not None
    s_pad = p.w1.shape[0]                                # == state_dim if not K-tiled

    if block_b is None:
        block_b = _choose_block_b(b, k_tiled)
    if block_b >= b:
        block_b = b
        b_pad = b
    else:
        block_b = _round_up(block_b, 8)
        b_pad = _round_up(b, block_b)

    # Only pad when actually tiling (rows) or K-tiling (cols); zeros are inert.
    k_width = s_pad if k_tiled else p.state_dim
    if b_pad != b or k_width != p.state_dim:
        x_in = (jnp.zeros((b_pad, k_width), jnp.float32)
                .at[:b, :p.state_dim].set(x2d))
    else:
        x_in = x2d

    # --- honest VMEM budget (residents x2: Pallas double-buffers by default;
    # (1,H) biases occupy 8 sublanes) and generation-aware limit -------------
    x_tile_k = p.block_k if k_tiled else k_width
    w1_tile_k = p.block_k if k_tiled else s_pad
    vmem_bytes = (
        2 * block_b * x_tile_k * 4                               # x tiles (f32, 2 bufs)
        + 2 * block_b * a_pad * 4                                # out tiles (f32, 2 bufs)
        + 2 * (w1_tile_k * _H1 + _H1 * _H2 + _H2 * a_pad) * 2    # bf16 weights, 2 bufs
        + 2 * 8 * (_H1 + _H2 + a_pad) * 4                        # biases @ 8 sublanes, 2 bufs
        + block_b * (_H1 + _H2 + a_pad) * 4                      # f32 intermediates
        + block_b * _H1 * 4                                      # fc1 accumulator headroom
        + block_b * max(x_tile_k, _H1) * 2                       # bf16 casts of x / h
    )
    cap = (3 * _vmem_capacity_bytes()) // 4                      # headroom for compiler scratch
    vmem_limit = int(min(cap, max(32 << 20, 2 * vmem_bytes)))

    kernel_args = (x_in, p.w1, p.b1, p.w2, p.b2, p.w3, p.b3)

    if not k_tiled:
        grid = (b_pad // block_b,)
        kernel = functools.partial(_actor_kernel, action_bound=float(action_bound))
        in_specs = [
            pl.BlockSpec((block_b, k_width), lambda i: (i, 0)),   # x (unpadded K)
            pl.BlockSpec((k_width, _H1), lambda i: (0, 0)),       # w1 (VMEM-resident)
            pl.BlockSpec((1, _H1), lambda i: (0, 0)),             # b1
            pl.BlockSpec((_H1, _H2), lambda i: (0, 0)),           # w2
            pl.BlockSpec((1, _H2), lambda i: (0, 0)),             # b2
            pl.BlockSpec((_H2, a_pad), lambda i: (0, 0)),         # w3 (padded cols)
            pl.BlockSpec((1, a_pad), lambda i: (0, 0)),           # b3 (padded cols)
        ]
        out_specs = pl.BlockSpec((block_b, a_pad), lambda i: (i, 0))
        scratch_shapes = []
        semantics = ("parallel",)
    else:
        nk = s_pad // p.block_k
        grid = (b_pad // block_b, nk)                             # reduction axis last
        kernel = functools.partial(_actor_kernel_ktiled,
                                   action_bound=float(action_bound))
        in_specs = [
            pl.BlockSpec((block_b, p.block_k), lambda i, k: (i, k)),   # x K-tiled
            pl.BlockSpec((p.block_k, _H1), lambda i, k: (k, 0)),       # w1 K-tiled
            pl.BlockSpec((1, _H1), lambda i, k: (0, 0)),               # b1
            pl.BlockSpec((_H1, _H2), lambda i, k: (0, 0)),             # w2
            pl.BlockSpec((1, _H2), lambda i, k: (0, 0)),               # b2
            pl.BlockSpec((_H2, a_pad), lambda i, k: (0, 0)),           # w3
            pl.BlockSpec((1, a_pad), lambda i, k: (0, 0)),             # b3
        ]
        out_specs = pl.BlockSpec((block_b, a_pad), lambda i, k: (i, 0))
        scratch_shapes = [pltpu.VMEM((block_b, _H1), jnp.float32)]     # fc1 accumulator
        semantics = ("parallel", "arbitrary")

    out = pl.pallas_call(
        kernel,
        out_shape=jax.ShapeDtypeStruct((b_pad, a_pad), jnp.float32),
        grid=grid,
        in_specs=in_specs,
        out_specs=out_specs,
        scratch_shapes=scratch_shapes,
        compiler_params=pltpu.CompilerParams(
            dimension_semantics=semantics,
            vmem_limit_bytes=vmem_limit),
    )(*kernel_args)

    return out[:b, :p.action_dim]


# ----------------------------------------------------------------------------
# Init + references + test
# ----------------------------------------------------------------------------
def init_actor_params(key, state_dim, action_dim):
    """Deterministic init mimicking nn.Linear defaults (U[-1/sqrt(fan_in), +])."""
    def linear(key, fan_in, fan_out):
        kw, kb = jax.random.split(key)
        bound = 1.0 / jnp.sqrt(jnp.float32(fan_in))
        # Stored as (in, out) so the kernel computes x @ W + b.
        w = jax.random.uniform(kw, (fan_in, fan_out), jnp.float32, -bound, bound)
        b = jax.random.uniform(kb, (1, fan_out), jnp.float32, -bound, bound)
        return w, b

    k1, k2, k3 = jax.random.split(key, 3)
    w1, b1 = linear(k1, state_dim, _H1)
    w2, b2 = linear(k2, _H1, _H2)
    w3, b3 = linear(k3, _H2, action_dim)
    return (w1, b1, w2, b2, w3, b3)


def _reference_forward(x, raw_params, action_bound, *, bf16):
    w1, b1, w2, b2, w3, b3 = raw_params
    xf = x.reshape(x.shape[0], -1).astype(jnp.float32)
    if bf16:
        def dot(a, w):
            return jnp.dot(a.astype(jnp.bfloat16), w.astype(jnp.bfloat16),
                           preferred_element_type=jnp.float32)
    else:
        def dot(a, w):
            return jnp.dot(a, w)
    h = jnp.maximum(dot(xf, w1) + b1, 0.0)
    h = jnp.maximum(dot(h, w2) + b2, 0.0)
    return jnp.tanh(dot(h, w3) + b3) * action_bound


if __name__ == "__main__":
    key = jax.random.PRNGKey(0)
    k_params, k_x, k_params2, k_x2 = jax.random.split(key, 4)

    # --- Case 1: module-consistent tiny shapes, fused single-step path ------
    # batch=2, input (2,4,4,2) flattens to state_dim=32, 4 actions, bound=2.0
    batch, state_dim, action_dim, action_bound = 2, 32, 4, 2.0
    params = init_actor_params(k_params, state_dim, action_dim)
    prepared = prepare_actor_params(params)              # one-time pad/cast
    x = jax.random.normal(k_x, (batch, 4, 4, 2), jnp.float32)

    out = actor_forward(x, prepared, action_bound)
    jax.block_until_ready(out)
    assert out.shape == (batch, action_dim)

    ref_bf16 = _reference_forward(x, params, action_bound, bf16=True)
    ref_f32 = _reference_forward(x, params, action_bound, bf16=False)
    assert jnp.allclose(out, ref_bf16, atol=2e-3, rtol=2e-3)
    assert jnp.allclose(out, ref_f32, atol=1e-1, rtol=1e-1)

    # --- Case 2: exercise K-tiled fc1 + multi-step batch grid + padding -----
    batch2, state_dim2, action_dim2, bound2 = 20, 200, 3, 1.0
    params2 = init_actor_params(k_params2, state_dim2, action_dim2)
    prepared2 = prepare_actor_params(params2, block_k=128)   # force K tiling
    x2 = jax.random.normal(k_x2, (batch2, state_dim2), jnp.float32)

    out2 = actor_forward(x2, prepared2, bound2, block_b=8)   # force batch tiling
    jax.block_until_ready(out2)
    assert out2.shape == (batch2, action_dim2)

    ref2_bf16 = _reference_forward(x2, params2, bound2, bf16=True)
    ref2_f32 = _reference_forward(x2, params2, bound2, bf16=False)
    assert jnp.allclose(out2, ref2_bf16, atol=5e-3, rtol=5e-3)
    assert jnp.allclose(out2, ref2_f32, atol=1e-1, rtol=1e-1)

    print("KERNEL_OK")
</pallas_src>

<mosaic_0001>
module attributes {stable_mosaic.version = 11 : i64} {
  func.func @_actor_kernel(%arg0: i32, %arg1: memref<2x32xf32, #tpu.memory_space<vmem>>, %arg2: memref<32x256xbf16, #tpu.memory_space<vmem>>, %arg3: memref<1x256xf32, #tpu.memory_space<vmem>>, %arg4: memref<256x128xbf16, #tpu.memory_space<vmem>>, %arg5: memref<1x128xf32, #tpu.memory_space<vmem>>, %arg6: memref<128x128xbf16, #tpu.memory_space<vmem>>, %arg7: memref<1x128xf32, #tpu.memory_space<vmem>>, %arg8: memref<2x128xf32, #tpu.memory_space<vmem>>) attributes {dimension_semantics = [#tpu.dimension_semantics<parallel>], iteration_bounds = array<i64: 1>, scalar_prefetch = 0 : i64, scratch_operands = 0 : i64, tpu.core_type = #tpu.core_type<tc>, window_params = [{transform_indices = @transform_0, window_bounds = array<i64: 2, 32>}, {pipeline_mode = #tpu.pipeline_mode<synchronous>, transform_indices = @transform_1, window_bounds = array<i64: 32, 256>}, {pipeline_mode = #tpu.pipeline_mode<synchronous>, transform_indices = @transform_2, window_bounds = array<i64: 1, 256>}, {pipeline_mode = #tpu.pipeline_mode<synchronous>, transform_indices = @transform_3, window_bounds = array<i64: 256, 128>}, {pipeline_mode = #tpu.pipeline_mode<synchronous>, transform_indices = @transform_4, window_bounds = array<i64: 1, 128>}, {pipeline_mode = #tpu.pipeline_mode<synchronous>, transform_indices = @transform_5, window_bounds = array<i64: 128, 128>}, {pipeline_mode = #tpu.pipeline_mode<synchronous>, transform_indices = @transform_6, window_bounds = array<i64: 1, 128>}, {transform_indices = @transform_7, window_bounds = array<i64: 2, 128>}]} {
    %c0 = arith.constant 0 : index
    %c0_0 = arith.constant 0 : index
    %0 = vector.load %arg1[%c0, %c0_0] : memref<2x32xf32, #tpu.memory_space<vmem>>, vector<2x32xf32>
    %1 = arith.truncf %0 : vector<2x32xf32> to vector<2x32xbf16>
    %c0_1 = arith.constant 0 : index
    %c0_2 = arith.constant 0 : index
    %2 = vector.load %arg2[%c0_1, %c0_2] : memref<32x256xbf16, #tpu.memory_space<vmem>>, vector<32x256xbf16>
    %cst = arith.constant dense<0.000000e+00> : vector<2x256xf32>
    %3 = tpu.matmul %1, %2, %cst {dimension_numbers = #tpu.dot_dimension_numbers<[1], [0], [0], [1], [0, 0, 1, 1], [], []>} : vector<2x32xbf16>, vector<32x256xbf16>, vector<2x256xf32> -> vector<2x256xf32>
    %c0_3 = arith.constant 0 : index
    %c0_4 = arith.constant 0 : index
    %4 = vector.load %arg3[%c0_3, %c0_4] : memref<1x256xf32, #tpu.memory_space<vmem>>, vector<1x256xf32>
    %5 = vector.broadcast %4 : vector<1x256xf32> to vector<2x256xf32>
    %6 = arith.addf %3, %5 : vector<2x256xf32>
    %cst_5 = arith.constant 0.000000e+00 : f32
    %7 = vector.broadcast %cst_5 : f32 to vector<2x256xf32>
    %8 = arith.maximumf %6, %7 : vector<2x256xf32>
    %9 = arith.truncf %8 : vector<2x256xf32> to vector<2x256xbf16>
    %c0_6 = arith.constant 0 : index
    %c0_7 = arith.constant 0 : index
    %10 = vector.load %arg4[%c0_6, %c0_7] : memref<256x128xbf16, #tpu.memory_space<vmem>>, vector<256x128xbf16>
    %cst_8 = arith.constant dense<0.000000e+00> : vector<2x128xf32>
    %11 = tpu.matmul %9, %10, %cst_8 {dimension_numbers = #tpu.dot_dimension_numbers<[1], [0], [0], [1], [0, 0, 1, 1], [], []>} : vector<2x256xbf16>, vector<256x128xbf16>, vector<2x128xf32> -> vector<2x128xf32>
    %c0_9 = arith.constant 0 : index
    %c0_10 = arith.constant 0 : index
    %12 = vector.load %arg5[%c0_9, %c0_10] : memref<1x128xf32, #tpu.memory_space<vmem>>, vector<1x128xf32>
    %13 = vector.broadcast %12 : vector<1x128xf32> to vector<2x128xf32>
    %14 = arith.addf %11, %13 : vector<2x128xf32>
    %cst_11 = arith.constant 0.000000e+00 : f32
    %15 = vector.broadcast %cst_11 : f32 to vector<2x128xf32>
    %16 = arith.maximumf %14, %15 : vector<2x128xf32>
    %17 = arith.truncf %16 : vector<2x128xf32> to vector<2x128xbf16>
    %c0_12 = arith.constant 0 : index
    %c0_13 = arith.constant 0 : index
    %18 = vector.load %arg6[%c0_12, %c0_13] : memref<128x128xbf16, #tpu.memory_space<vmem>>, vector<128x128xbf16>
    %cst_14 = arith.constant dense<0.000000e+00> : vector<2x128xf32>
    %19 = tpu.matmul %17, %18, %cst_14 {dimension_numbers = #tpu.dot_dimension_numbers<[1], [0], [0], [1], [0, 0, 1, 1], [], []>} : vector<2x128xbf16>, vector<128x128xbf16>, vector<2x128xf32> -> vector<2x128xf32>
    %c0_15 = arith.constant 0 : index
    %c0_16 = arith.constant 0 : index
    %20 = vector.load %arg7[%c0_15, %c0_16] : memref<1x128xf32, #tpu.memory_space<vmem>>, vector<1x128xf32>
    %21 = vector.broadcast %20 : vector<1x128xf32> to vector<2x128xf32>
    %22 = arith.addf %19, %21 : vector<2x128xf32>
    %23 = math.tanh %22 : vector<2x128xf32>
    %cst_17 = arith.constant 2.000000e+00 : f32
    %24 = vector.broadcast %cst_17 : f32 to vector<2x128xf32>
    %25 = arith.mulf %23, %24 : vector<2x128xf32>
    %c0_18 = arith.constant 0 : index
    %c0_19 = arith.constant 0 : index
    %26 = vector.load %arg8[%c0_18, %c0_19] : memref<2x128xf32, #tpu.memory_space<vmem>>, vector<2x128xf32>
    tpu.vector_store %arg8[%c0_18, %c0_19], %25 {strides = array<i32>} : memref<2x128xf32, #tpu.memory_space<vmem>>, vector<2x128xf32>,
    return
  }
  func.func @transform_0(%arg0: i32) -> (i32, i32) {
    %c0_i32 = arith.constant 0 : i32
    %c0_i32_0 = arith.constant 0 : i32
    return %arg0, %c0_i32 : i32, i32
  }
  func.func @transform_1(%arg0: i32) -> (i32, i32) {
    %c0_i32 = arith.constant 0 : i32
    %c0_i32_0 = arith.constant 0 : i32
    %c0_i32_1 = arith.constant 0 : i32
    return %c0_i32, %c0_i32_0 : i32, i32
  }
  func.func @transform_2(%arg0: i32) -> (i32, i32) {
    %c0_i32 = arith.constant 0 : i32
    %c0_i32_0 = arith.constant 0 : i32
    %c0_i32_1 = arith.constant 0 : i32
    return %c0_i32, %c0_i32_0 : i32, i32
  }
  func.func @transform_3(%arg0: i32) -> (i32, i32) {
    %c0_i32 = arith.constant 0 : i32
    %c0_i32_0 = arith.constant 0 : i32
    %c0_i32_1 = arith.constant 0 : i32
    return %c0_i32, %c0_i32_0 : i32, i32
  }
  func.func @transform_4(%arg0: i32) -> (i32, i32) {
    %c0_i32 = arith.constant 0 : i32
    %c0_i32_0 = arith.constant 0 : i32
    %c0_i32_1 = arith.constant 0 : i32
    return %c0_i32, %c0_i32_0 : i32, i32
  }
  func.func @transform_5(%arg0: i32) -> (i32, i32) {
    %c0_i32 = arith.constant 0 : i32
    %c0_i32_0 = arith.constant 0 : i32
    %c0_i32_1 = arith.constant 0 : i32
    return %c0_i32, %c0_i32_0 : i32, i32
  }
  func.func @transform_6(%arg0: i32) -> (i32, i32) {
    %c0_i32 = arith.constant 0 : i32
    %c0_i32_0 = arith.constant 0 : i32
    %c0_i32_1 = arith.constant 0 : i32
    return %c0_i32, %c0_i32_0 : i32, i32
  }
  func.func @transform_7(%arg0: i32) -> (i32, i32) {
    %c0_i32 = arith.constant 0 : i32
    %c0_i32_0 = arith.constant 0 : i32
    return %arg0, %c0_i32 : i32, i32
  }
}

</mosaic_0001>

<llo_original>
// kernel: tpu_custom_call.1
$region0: #{tpu_custom_call.1}
  #allocation0 [shape = 'u32[]', space=smem, size = 0x4, offset = 0x4, fixed_abs, tag = 'smem constant byte address 0x4 - core index']
  #allocation1 [shape = 'u32[144,128]{1,0:T(1,128)}', space=vmem, size = 0x12000, scoped, tag = 'internal scratch']
  %s0 = inlined_call_operand.hbm [shape: f32[2,32], index: 0, kind: input, shape index: {}]
  %s1 = inlined_call_operand.hbm [shape: bf16[32,256], index: 1, kind: input, shape index: {}]
  %s2 = inlined_call_operand.vmem [shape: f32[1,256], index: 2, kind: input, shape index: {}]
  %s3 = inlined_call_operand.hbm [shape: bf16[256,128], index: 3, kind: input, shape index: {}]
  %s4 = inlined_call_operand.vmem [shape: f32[1,128], index: 4, kind: input, shape index: {}]
  %s5 = inlined_call_operand.hbm [shape: bf16[128,128], index: 5, kind: input, shape index: {}]
  %s6 = inlined_call_operand.vmem [shape: f32[1,128], index: 6, kind: input, shape index: {}]
  %s7 = inlined_call_operand.hbm [shape: f32[2,128], index: 7, kind: output, shape index: {}]
  %s8 = sld [smem:[#allocation0]]
  $region54: #{tpu_custom_call.1} parent=0
    _
  %s10 = ssub.s32 1, %s8
  %s11 = scalar_select 0, %s10, %s8
  $region1: #{tpu_custom_call.1} parent=0
    #allocation2 [shape = 'u8[1024]{0}', space=vmem, size = 0x400, scoped, tag = 'input window, operand 0, single buffered']
    #allocation3 [shape = 's32[1]{0}', space=sflag, size = 0x4, scoped, tag = 'scoped memory for tpu_custom_call.1']
    #allocation4 [shape = 's32[1]{0}', space=sflag, size = 0x4, scoped, tag = 'scoped memory for tpu_custom_call.1']
    #allocation5 [shape = 'u8[16384]{0}', space=vmem, size = 0x4000, scoped, tag = 'input window, operand 1, single buffered']
    #allocation6 [shape = 's32[1]{0}', space=sflag, size = 0x4, scoped, tag = 'scoped memory for tpu_custom_call.1']
    #allocation7 [shape = 'u8[65536]{0}', space=vmem, size = 0x10000, scoped, tag = 'input window, operand 3, single buffered']
    #allocation8 [shape = 'u8[32768]{0}', space=vmem, size = 0x8000, scoped, tag = 'input window, operand 5, single buffered']
    #allocation9 [shape = 's32[1]{0}', space=sflag, size = 0x4, scoped, tag = 'scoped memory for tpu_custom_call.1']
    #allocation10 [shape = 'u8[1024]{0}', space=vmem, size = 0x400, scoped, tag = 'output window, operand 0, single buffered']
    %12 = vsyncpa [#allocation3], 0
    %13 = vsyncpa [#allocation6], 0
    %14 = vsyncpa [#allocation9], 0
    %15 = vsyncpa [#allocation4], 0
    // Predicated region
    $region2: #{tpu_custom_call.1} parent=1 // pred_check
      _
    $region3: #{tpu_custom_call.1} parent=1 // pred_check_branch
      %17 = sbr.rel (0) target = $region5
    $region4: #{tpu_custom_call.1} parent=1 // pred_region
      %s19 = ssub.s32 32, 32
      %20 = vsyncadd [#allocation3], %s19
      %s22 = sshll.u32 [#allocation2], 4
      %s23 = int_to_ptr.vmem [resolvable:$true] %s22
      %25 = dma.hbm_to_vmem [thread:$0]  %s0, 32, %s23, [#allocation3]
    $region5: #{tpu_custom_call.1} parent=1 // pred_fallthru
      _
    // Predicated region
    $region6: #{tpu_custom_call.1} parent=1 // pred_check
      _
    $region7: #{tpu_custom_call.1} parent=1 // pred_check_branch
      %27 = sbr.rel (0) target = $region9
    $region8: #{tpu_custom_call.1} parent=1 // pred_region
      %s29 = ssub.s32 512, 512
      %30 = vsyncadd [#allocation6], %s29
      %s31 = sshll.u32 [#allocation5], 4
      %s32 = int_to_ptr.vmem [resolvable:$true] %s31
      %37 = dma.hbm_to_vmem [thread:$0]  %s1, 512, %s32, [#allocation6], 128, 128, 8
    $region9: #{tpu_custom_call.1} parent=1 // pred_fallthru
      _
    // Predicated region
    $region10: #{tpu_custom_call.1} parent=1 // pred_check
      _
    $region11: #{tpu_custom_call.1} parent=1 // pred_check_branch
      %39 = sbr.rel (0) target = $region13
    $region12: #{tpu_custom_call.1} parent=1 // pred_region
      _
    $region13: #{tpu_custom_call.1} parent=1 // pred_fallthru
      _
    // Predicated region
    $region14: #{tpu_custom_call.1} parent=1 // pred_check
      _
    $region15: #{tpu_custom_call.1} parent=1 // pred_check_branch
      %41 = sbr.rel (0) target = $region17
    $region16: #{tpu_custom_call.1} parent=1 // pred_region
      %s43 = ssub.s32 2048, 2048
      %44 = vsyncadd [#allocation6], %s43
      %s45 = sshll.u32 [#allocation7], 4
      %s46 = int_to_ptr.vmem [resolvable:$true] %s45
      %51 = dma.hbm_to_vmem [thread:$0]  %s3, 2048, %s46, [#allocation6], 64, 64, 4
    $region17: #{tpu_custom_call.1} parent=1 // pred_fallthru
      _
    // Predicated region
    $region18: #{tpu_custom_call.1} parent=1 // pred_check
      _
    $region19: #{tpu_custom_call.1} parent=1 // pred_check_branch
      %53 = sbr.rel (0) target = $region21
    $region20: #{tpu_custom_call.1} parent=1 // pred_region
      _
    $region21: #{tpu_custom_call.1} parent=1 // pred_fallthru
      _
    // Predicated region
    $region22: #{tpu_custom_call.1} parent=1 // pred_check
      _
    $region23: #{tpu_custom_call.1} parent=1 // pred_check_branch
      %55 = sbr.rel (0) target = $region25
    $region24: #{tpu_custom_call.1} parent=1 // pred_region
      %s57 = ssub.s32 1024, 1024
      %58 = vsyncadd [#allocation9], %s57
      %s59 = sshll.u32 [#allocation8], 4
      %s60 = int_to_ptr.vmem [resolvable:$true] %s59
      %65 = dma.hbm_to_vmem [thread:$0]  %s5, 1024, %s60, [#allocation9], 64, 64, 4
    $region25: #{tpu_custom_call.1} parent=1 // pred_fallthru
      _
    // Predicated region
    $region26: #{tpu_custom_call.1} parent=1 // pred_check
      _
    $region27: #{tpu_custom_call.1} parent=1 // pred_check_branch
      %67 = sbr.rel (0) target = $region29
    $region28: #{tpu_custom_call.1} parent=1 // pred_region
      _
    $region29: #{tpu_custom_call.1} parent=1 // pred_fallthru
      _
    // Predicated region
    $region30: #{tpu_custom_call.1} parent=1 // pred_check
      _
    $region31: #{tpu_custom_call.1} parent=1 // pred_check_branch
      %69 = sbr.rel (0) target = $region33
    $region32: #{tpu_custom_call.1} parent=1 // pred_region
      %70 = dma.done [#allocation3], 32
    $region33: #{tpu_custom_call.1} parent=1 // pred_fallthru
      _
    // Predicated region
    $region34: #{tpu_custom_call.1} parent=1 // pred_check
      _
    $region35: #{tpu_custom_call.1} parent=1 // pred_check_branch
      %72 = sbr.rel (0) target = $region37
    $region36: #{tpu_custom_call.1} parent=1 // pred_region
      %73 = dma.done [#allocation6], 512
    $region37: #{tpu_custom_call.1} parent=1 // pred_fallthru
      _
    // Predicated region
    $region38: #{tpu_custom_call.1} parent=1 // pred_check
      _
    $region39: #{tpu_custom_call.1} parent=1 // pred_check_branch
      %75 = sbr.rel (0) target = $region41
    $region40: #{tpu_custom_call.1} parent=1 // pred_region
      %76 = dma.done [#allocation6], 2048
    $region41: #{tpu_custom_call.1} parent=1 // pred_fallthru
      _
    // Predicated region
    $region42: #{tpu_custom_call.1} parent=1 // pred_check
      _
    $region43: #{tpu_custom_call.1} parent=1 // pred_check_branch
      %78 = sbr.rel (0) target = $region45
    $region44: #{tpu_custom_call.1} parent=1 // pred_region
      %79 = dma.done [#allocation9], 1024
    $region45: #{tpu_custom_call.1} parent=1 // pred_fallthru
      _
    %v81 = vld [vmem:[#allocation2] sm:$0x3]
    %v82 = vpack.c.bf16 %v81, %v81
    %v83 = vld [vmem:[#allocation5] sm:$0xff]
    %v84 = vld [vmem:[#allocation5 + $0x8] sm:$0xff]
    %v85 = vld [vmem:[#allocation5 + $0x10] sm:$0xff]
    %v86 = vld [vmem:[#allocation5 + $0x18] sm:$0xff]
    %v87 = vld [vmem:[%s2] sm:$0x3]
    %v89 = vlaneseq
    %v90 = vshrl.u32 %v89, 7
    %v91 = vsub.s32 0, %v90
    %v92 = vrot.slane %v87, %v91
    %v93 = vlaneseq
    %v94 = vshrl.u32 %v93, 7
    %v95 = vsub.s32 1, %v94
    %v96 = vrot.slane %v87, %v95
    %v103 = vunpack.c.l.b16 %v83
    %v104 = vunpack.c.h.b16 %v83
    %v105 = vunpack.c.l.b16 %v84
    %v106 = vunpack.c.h.b16 %v84
    %v107 = vunpack.c.l.b16 %v85
    %v108 = vunpack.c.h.b16 %v85
    %v109 = vunpack.c.l.b16 %v86
    %v110 = vunpack.c.h.b16 %v86
    %v111 = vpack.c.b16 %v105, %v103
    %v112 = vpack.c.b16 %v106, %v104
    %v113 = vpack.c.b16 %v109, %v107
    %v114 = vpack.c.b16 %v110, %v108
    %vm119 = vcmask 261120
    %v121 = vsel %vm119, %v82, 0
    %123 = vmatprep.subr.bf16.mxu0 %v112
    %124 = vmatpush1.bf16.msra.mxu0 %v111
    %125 = vmatprep.subr.bf16.mxu0 %v114
    %126 = vmatpush1.bf16.msra.mxu0 %v113
    %127 = vmatprep.subr.bf16.mxu0 0
    %128 = vmatpush1.bf16.msra.mxu0 0
    %129 = vmatprep.subr.bf16.mxu0 0
    %130 = vmatpush1.bf16.msra.mxu0 0
    %131 = vmatprep.subr.bf16.mxu0 0
    %132 = vmatpush1.bf16.msra.mxu0 0
    %133 = vmatprep.subr.bf16.mxu0 0
    %134 = vmatpush1.bf16.msra.mxu0 0
    %135 = vmatprep.subr.bf16.mxu0 0
    %136 = vmatpush1.bf16.msra.mxu0 0
    %137 = vmatprep.subr.bf16.mxu0 0
    %138 = vmatpush1.bf16.msra.mxu0 0
    %139 = vmatprep.subr.bf16.mxu0 0
    %140 = vmatpush1.bf16.msra.mxu0 0
    %141 = vmatprep.subr.bf16.mxu0 0
    %142 = vmatpush1.bf16.msra.mxu0 0
    %143 = vmatprep.subr.bf16.mxu0 0
    %144 = vmatpush1.bf16.msra.mxu0 0
    %145 = vmatprep.subr.bf16.mxu0 0
    %146 = vmatpush1.bf16.msra.mxu0 0
    %147 = vmatprep.subr.bf16.mxu0 0
    %148 = vmatpush1.bf16.msra.mxu0 0
    %149 = vmatprep.subr.bf16.mxu0 0
    %150 = vmatpush1.bf16.msra.mxu0 0
    %151 = vmatprep.subr.bf16.mxu0 0
    %152 = vmatpush1.bf16.msra.mxu0 0
    %153 = vmatprep.subr.bf16.mxu0 0
    %154 = vmatpush1.bf16.msra.mxu0 0
    %155 = vmatprep.mubr.bf16.mxu0 0
    %156 = vmatmul.mubr.bf16.gmra.mrb[0].mxu0 %v121
    %v157 = vpop.f32.mrb[0].mxu0
    %v158 = vadd.f32 %v92, %v157
    %v159 = vpop.f32.mrb[0].mxu0
    %v160 = vadd.f32 %v96, %v159
    %v161 = vpop.f32.mrb[0].mxu0
    %v162 = vpop.f32.mrb[0].mxu0
    %163 = vdwg.mxu0
    %v164 = vmax.f32 %v158, 0.0
    %v165 = vmax.f32 %v160, 0.0
    %v166 = vpack.c.bf16 %v164, %v164
    %v167 = vpack.c.bf16 %v165, %v165
    %v168 = vld [vmem:[#allocation7] sm:$0xf]
    %v169 = vld [vmem:[#allocation7 + $0x4] sm:$0xf]
    %v170 = vld [vmem:[#allocation7 + $0x8] sm:$0xf]
    %v171 = vld [vmem:[#allocation7 + $0xc] sm:$0xf]
    %v172 = vld [vmem:[#allocation7 + $0x10] sm:$0xf]
    %v173 = vld [vmem:[#allocation7 + $0x14] sm:$0xf]
    %v174 = vld [vmem:[#allocation7 + $0x18] sm:$0xf]
    %v175 = vld [vmem:[#allocation7 + $0x1c] sm:$0xf]
    %v176 = vld [vmem:[#allocation7 + $0x20] sm:$0xf]
    %v177 = vld [vmem:[#allocation7 + $0x24] sm:$0xf]
    %v178 = vld [vmem:[#allocation7 + $0x28] sm:$0xf]
    %v179 = vld [vmem:[#allocation7 + $0x2c] sm:$0xf]
    %v180 = vld [vmem:[#allocation7 + $0x30] sm:$0xf]
    %v181 = vld [vmem:[#allocation7 + $0x34] sm:$0xf]
    %v182 = vld [vmem:[#allocation7 + $0x38] sm:$0xf]
    %v183 = vld [vmem:[#allocation7 + $0x3c] sm:$0xf]
    %v184 = vld [vmem:[#allocation7 + $0x40] sm:$0xf]
    %v185 = vld [vmem:[#allocation7 + $0x44] sm:$0xf]
    %v186 = vld [vmem:[#allocation7 + $0x48] sm:$0xf]
    %v187 = vld [vmem:[#allocation7 + $0x4c] sm:$0xf]
    %v188 = vld [vmem:[#allocation7 + $0x50] sm:$0xf]
    %v189 = vld [vmem:[#allocation7 + $0x54] sm:$0xf]
    %v190 = vld [vmem:[#allocation7 + $0x58] sm:$0xf]
    %v191 = vld [vmem:[#allocation7 + $0x5c] sm:$0xf]
    %v192 = vld [vmem:[#allocation7 + $0x60] sm:$0xf]
    %v193 = vld [vmem:[#allocation7 + $0x64] sm:$0xf]
    %v194 = vld [vmem:[#allocation7 + $0x68] sm:$0xf]
    %v195 = vld [vmem:[#allocation7 + $0x6c] sm:$0xf]
    %v196 = vld [vmem:[#allocation7 + $0x70] sm:$0xf]
    %v197 = vld [vmem:[#allocation7 + $0x74] sm:$0xf]
    %v198 = vld [vmem:[#allocation7 + $0x78] sm:$0xf]
    %v199 = vld [vmem:[#allocation7 + $0x7c] sm:$0xf]
    %v200 = vld [vmem:[%s4] sm:$0x1]
    %v202 = vlaneseq
    %v203 = vshrl.u32 %v202, 7
    %v204 = vsub.s32 0, %v203
    %v205 = vrot.slane %v200, %v204
    %v239 = vunpack.c.l.b16 %v168
    %v240 = vunpack.c.l.b16 %v169
    %v241 = vunpack.c.l.b16 %v170
    %v242 = vunpack.c.l.b16 %v171
    %v243 = vunpack.c.l.b16 %v172
    %v244 = vunpack.c.l.b16 %v173
    %v245 = vunpack.c.l.b16 %v174
    %v246 = vunpack.c.l.b16 %v175
    %v247 = vunpack.c.l.b16 %v176
    %v248 = vunpack.c.l.b16 %v177
    %v249 = vunpack.c.l.b16 %v178
    %v250 = vunpack.c.l.b16 %v179
    %v251 = vunpack.c.l.b16 %v180
    %v252 = vunpack.c.l.b16 %v181
    %v253 = vunpack.c.l.b16 %v182
    %v254 = vunpack.c.l.b16 %v183
    %v255 = vunpack.c.l.b16 %v184
    %v256 = vunpack.c.l.b16 %v185
    %v257 = vunpack.c.l.b16 %v186
    %v258 = vunpack.c.l.b16 %v187
    %v259 = vunpack.c.l.b16 %v188
    %v260 = vunpack.c.l.b16 %v189
    %v261 = vunpack.c.l.b16 %v190
    %v262 = vunpack.c.l.b16 %v191
    %v263 = vunpack.c.l.b16 %v192
    %v264 = vunpack.c.l.b16 %v193
    %v265 = vunpack.c.l.b16 %v194
    %v266 = vunpack.c.l.b16 %v195
    %v267 = vunpack.c.l.b16 %v196
    %v268 = vunpack.c.l.b16 %v197
    %v269 = vunpack.c.l.b16 %v198
    %v270 = vunpack.c.l.b16 %v199
    %v271 = vpack.c.b16 %v240, %v239
    %v272 = vpack.c.b16 %v242, %v241
    %v273 = vpack.c.b16 %v244, %v243
    %v274 = vpack.c.b16 %v246, %v245
    %v275 = vpack.c.b16 %v248, %v247
    %v276 = vpack.c.b16 %v250, %v249
    %v277 = vpack.c.b16 %v252, %v251
    %v278 = vpack.c.b16 %v254, %v253
    %v279 = vpack.c.b16 %v256, %v255
    %v280 = vpack.c.b16 %v258, %v257
    %v281 = vpack.c.b16 %v260, %v259
    %v282 = vpack.c.b16 %v262, %v261
    %v283 = vpack.c.b16 %v264, %v263
    %v284 = vpack.c.b16 %v266, %v265
    %v285 = vpack.c.b16 %v268, %v267
    %v286 = vpack.c.b16 %v270, %v269
    %303 = vmatprep.subr.bf16.mxu0 0
    %304 = vmatpush1.bf16.msra.mxu0 %v271
    %305 = vmatprep.subr.bf16.mxu0 0
    %306 = vmatpush1.bf16.msra.mxu0 %v272
    %307 = vmatprep.subr.bf16.mxu0 0
    %308 = vmatpush1.bf16.msra.mxu0 %v273
    %309 = vmatprep.subr.bf16.mxu0 0
    %310 = vmatpush1.bf16.msra.mxu0 %v274
    %311 = vmatprep.subr.bf16.mxu0 0
    %312 = vmatpush1.bf16.msra.mxu0 %v275
    %313 = vmatprep.subr.bf16.mxu0 0
    %314 = vmatpush1.bf16.msra.mxu0 %v276
    %315 = vmatprep.subr.bf16.mxu0 0
    %316 = vmatpush1.bf16.msra.mxu0 %v277
    %317 = vmatprep.subr.bf16.mxu0 0
    %318 = vmatpush1.bf16.msra.mxu0 %v278
    %319 = vmatprep.subr.bf16.mxu0 0
    %320 = vmatpush1.bf16.msra.mxu0 %v279
    %321 = vmatprep.subr.bf16.mxu0 0
    %322 = vmatpush1.bf16.msra.mxu0 %v280
    %323 = vmatprep.subr.bf16.mxu0 0
    %324 = vmatpush1.bf16.msra.mxu0 %v281
    %325 = vmatprep.subr.bf16.mxu0 0
    %326 = vmatpush1.bf16.msra.mxu0 %v282
    %327 = vmatprep.subr.bf16.mxu0 0
    %328 = vmatpush1.bf16.msra.mxu0 %v283
    %329 = vmatprep.subr.bf16.mxu0 0
    %330 = vmatpush1.bf16.msra.mxu0 %v284
    %331 = vmatprep.subr.bf16.mxu0 0
    %332 = vmatpush1.bf16.msra.mxu0 %v285
    %333 = vmatprep.subr.bf16.mxu0 0
    %334 = vmatpush1.bf16.msra.mxu0 %v286
    %335 = vmatprep.mubr.bf16.mxu0 %v167
    %336 = vmatmul.mubr.bf16.gmra.mrb[0].mxu0 %v166
    %v337 = vpop.f32.mrb[0].mxu0
    %v338 = vadd.f32 %v205, %v337
    %v339 = vpop.f32.mrb[0].mxu0
    %v340 = vpop.f32.mrb[0].mxu0
    %v341 = vpop.f32.mrb[0].mxu0
    %342 = vdwg.mxu0
    %v343 = vmax.f32 %v338, 0.0
    %v344 = vpack.c.bf16 %v343, %v343
    %v345 = vld [vmem:[#allocation8] sm:$0xf]
    %v346 = vld [vmem:[#allocation8 + $0x4] sm:$0xf]
    %v347 = vld [vmem:[#allocation8 + $0x8] sm:$0xf]
    %v348 = vld [vmem:[#allocation8 + $0xc] sm:$0xf]
    %v349 = vld [vmem:[#allocation8 + $0x10] sm:$0xf]
    %v350 = vld [vmem:[#allocation8 + $0x14] sm:$0xf]
    %v351 = vld [vmem:[#allocation8 + $0x18] sm:$0xf]
    %v352 = vld [vmem:[#allocation8 + $0x1c] sm:$0xf]
    %v353 = vld [vmem:[#allocation8 + $0x20] sm:$0xf]
    %v354 = vld [vmem:[#allocation8 + $0x24] sm:$0xf]
    %v355 = vld [vmem:[#allocation8 + $0x28] sm:$0xf]
    %v356 = vld [vmem:[#allocation8 + $0x2c] sm:$0xf]
    %v357 = vld [vmem:[#allocation8 + $0x30] sm:$0xf]
    %v358 = vld [vmem:[#allocation8 + $0x34] sm:$0xf]
    %v359 = vld [vmem:[#allocation8 + $0x38] sm:$0xf]
    %v360 = vld [vmem:[#allocation8 + $0x3c] sm:$0xf]
    %v361 = vld [vmem:[%s6] sm:$0x1]
    %v363 = vlaneseq
    %v364 = vshrl.u32 %v363, 7
    %v365 = vsub.s32 0, %v364
    %v366 = vrot.slane %v361, %v365
    %v384 = vunpack.c.l.b16 %v345
    %v385 = vunpack.c.l.b16 %v346
    %v386 = vunpack.c.l.b16 %v347
    %v387 = vunpack.c.l.b16 %v348
    %v388 = vunpack.c.l.b16 %v349
    %v389 = vunpack.c.l.b16 %v350
    %v390 = vunpack.c.l.b16 %v351
    %v391 = vunpack.c.l.b16 %v352
    %v392 = vunpack.c.l.b16 %v353
    %v393 = vunpack.c.l.b16 %v354
    %v394 = vunpack.c.l.b16 %v355
    %v395 = vunpack.c.l.b16 %v356
    %v396 = vunpack.c.l.b16 %v357
    %v397 = vunpack.c.l.b16 %v358
    %v398 = vunpack.c.l.b16 %v359
    %v399 = vunpack.c.l.b16 %v360
    %v400 = vpack.c.b16 %v385, %v384
    %v401 = vpack.c.b16 %v387, %v386
    %v402 = vpack.c.b16 %v389, %v388
    %v403 = vpack.c.b16 %v391, %v390
    %v404 = vpack.c.b16 %v393, %v392
    %v405 = vpack.c.b16 %v395, %v394
    %v406 = vpack.c.b16 %v397, %v396
    %v407 = vpack.c.b16 %v399, %v398
    %416 = vmatprep.subr.bf16.mxu0 0
    %417 = vmatpush1.bf16.msra.mxu0 %v400
    %418 = vmatprep.subr.bf16.mxu0 0
    %419 = vmatpush1.bf16.msra.mxu0 %v401
    %420 = vmatprep.subr.bf16.mxu0 0
    %421 = vmatpush1.bf16.msra.mxu0 %v402
    %422 = vmatprep.subr.bf16.mxu0 0
    %423 = vmatpush1.bf16.msra.mxu0 %v403
    %424 = vmatprep.subr.bf16.mxu0 0
    %425 = vmatpush1.bf16.msra.mxu0 %v404
    %426 = vmatprep.subr.bf16.mxu0 0
    %427 = vmatpush1.bf16.msra.mxu0 %v405
    %428 = vmatprep.subr.bf16.mxu0 0
    %429 = vmatpush1.bf16.msra.mxu0 %v406
    %430 = vmatprep.subr.bf16.mxu0 0
    %431 = vmatpush1.bf16.msra.mxu0 %v407
    %432 = vmatprep.subr.bf16.mxu0 0
    %433 = vmatpush1.bf16.msra.mxu0 0
    %434 = vmatprep.subr.bf16.mxu0 0
    %435 = vmatpush1.bf16.msra.mxu0 0
    %436 = vmatprep.subr.bf16.mxu0 0
    %437 = vmatpush1.bf16.msra.mxu0 0
    %438 = vmatprep.subr.bf16.mxu0 0
    %439 = vmatpush1.bf16.msra.mxu0 0
    %440 = vmatprep.subr.bf16.mxu0 0
    %441 = vmatpush1.bf16.msra.mxu0 0
    %442 = vmatprep.subr.bf16.mxu0 0
    %443 = vmatpush1.bf16.msra.mxu0 0
    %444 = vmatprep.subr.bf16.mxu0 0
    %445 = vmatpush1.bf16.msra.mxu0 0
    %446 = vmatprep.subr.bf16.mxu0 0
    %447 = vmatpush1.bf16.msra.mxu0 0
    %448 = vmatprep.mubr.bf16.mxu0 0
    %449 = vmatmul.mubr.bf16.gmra.mrb[0].mxu0 %v344
    %v450 = vpop.f32.mrb[0].mxu0
    %v451 = vadd.f32 %v366, %v450
    %v452 = vpop.f32.mrb[0].mxu0
    %v453 = vpop.f32.mrb[0].mxu0
    %v454 = vpop.f32.mrb[0].mxu0
    %455 = vdwg.mxu0
    %v456 = vtanh.pop %v451
    %v457 = vmul.f32 %v456, 2.0
    %458 = vst [vmem:[#allocation10] sm:$0x3] %v457
    // Predicated region
    $region46: #{tpu_custom_call.1} parent=1 // pred_check
      _
    $region47: #{tpu_custom_call.1} parent=1 // pred_check_branch
      %460 = sbr.rel (0) target = $region49
    $region48: #{tpu_custom_call.1} parent=1 // pred_region
      %s462 = ssub.s32 32, 32
      %463 = vsyncadd [#allocation4], %s462
      %s465 = sshll.u32 [#allocation10], 4
      %s466 = int_to_ptr.vmem [resolvable:$true] %s465
      %468 = dma.vmem_to_hbm [thread:$0]  %s466, 32, %s7, [#allocation4]
    $region49: #{tpu_custom_call.1} parent=1 // pred_fallthru
      _
    // Predicated region
    $region50: #{tpu_custom_call.1} parent=1 // pred_check
      _
    $region51: #{tpu_custom_call.1} parent=1 // pred_check_branch
      %470 = sbr.rel (0) target = $region53
    $region52: #{tpu_custom_call.1} parent=1 // pred_region
      %471 = dma.done [#allocation4], 32
    $region53: #{tpu_custom_call.1} parent=1 // pred_fallthru
      _
    %472 = vsyncpa [#allocation3], 1
    %473 = vsyncpa [#allocation6], 1
    %474 = vsyncpa [#allocation9], 1
    %475 = vsyncpa [#allocation4], 1

</llo_original>
